<compile_context>
chip_gen: v7x
topology: tpu7x:2x2x1
jax: 0.10.0
libtpu: 0.0.40
codegen_flags: <defaults>
</compile_context>

<pallas_src>
import jax
import jax.numpy as jnp
from jax import lax
from jax.experimental import pallas as pl
from jax.experimental.pallas import tpu as pltpu

NLAYERS = 6  # matches module-level `Nlayers`

LANE = 128     # lane width (last dim)
SUBLANE = 8    # f32 sublane count (second-to-last dim)


def _round_up(x, m):
    return (x + m - 1) // m * m


def _mlp_kernel(x_ref, w1_ref, b1_ref, w2_ref, b2_ref, w3_ref, b3_ref, o_ref):
    x = x_ref[...]

    # fc1 + relu  (f32 accumulation on the MXU)
    h = jnp.dot(x, w1_ref[...], preferred_element_type=jnp.float32)
    h = jnp.maximum(h + b1_ref[...].astype(jnp.float32), 0.0)

    # Hoist fc2 weight load and bias broadcast out of the unrolled loop body so
    # they are emitted once, not (NLAYERS - 1) times.
    w2 = w2_ref[...]
    b2 = jnp.broadcast_to(b2_ref[...].astype(jnp.float32), h.shape)

    def body(_, h_carry):
        h2 = jnp.dot(h_carry.astype(w2.dtype), w2,
                     preferred_element_type=jnp.float32)
        return jnp.maximum(h2 + b2, 0.0)

    # (NLAYERS - 1) applications of the SAME fc2 weights, each followed by relu.
    h = lax.fori_loop(0, NLAYERS - 1, body, h, unroll=True)

    # fc3 (no activation); lane-dense store of a (TILE_B, OUT_P) f32 tile.
    out = jnp.dot(h.astype(w3_ref.dtype), w3_ref[...],
                  preferred_element_type=jnp.float32)
    o_ref[...] = (out + b3_ref[...].astype(jnp.float32)).astype(o_ref.dtype)


def feedforward_pallas(x, w1, b1, w2, b2, w3, b3, *, tile_b=None,
                       param_dtype=None):
    """x: (B, input_size); w_i: (in, out); b_i: (1, out). Returns (B, output_size).

    param_dtype: optionally cast x and weights (e.g. jnp.bfloat16 on v6e/v7x);
    accumulation is always f32.
    """
    orig_dtype = x.dtype
    B, in_size = x.shape
    hidden = w1.shape[1]
    out_size = w3.shape[1]

    if param_dtype is not None:
        x = x.astype(param_dtype)
        w1, w2, w3 = (w.astype(param_dtype) for w in (w1, w2, w3))
        b1, b2, b3 = (b.astype(param_dtype) for b in (b1, b2, b3))

    # Pad feature dims to lane multiples (128) and batch to a sublane-aligned tile.
    in_p = _round_up(in_size, LANE)
    h_p = _round_up(hidden, LANE)
    out_p = _round_up(out_size, LANE)

    if tile_b is None:
        tile_b = min(_round_up(B, SUBLANE), 128)
    b_p = _round_up(B, tile_b)

    x_p = jnp.pad(x, ((0, b_p - B), (0, in_p - in_size)))
    w1_p = jnp.pad(w1, ((0, in_p - in_size), (0, h_p - hidden)))
    b1_p = jnp.pad(b1, ((0, 0), (0, h_p - hidden)))
    w2_p = jnp.pad(w2, ((0, h_p - hidden), (0, h_p - hidden)))
    b2_p = jnp.pad(b2, ((0, 0), (0, h_p - hidden)))
    w3_p = jnp.pad(w3, ((0, h_p - hidden), (0, out_p - out_size)))
    b3_p = jnp.pad(b3, ((0, 0), (0, out_p - out_size)))

    grid = (b_p // tile_b,)

    # Advisory cost hint for the XLA scheduler.
    flops = 2 * b_p * (in_p * h_p + (NLAYERS - 1) * h_p * h_p + h_p * out_p)
    bytes_accessed = (
        x_p.size * x_p.dtype.itemsize
        + sum(a.size * a.dtype.itemsize
              for a in (w1_p, b1_p, w2_p, b2_p, w3_p, b3_p))
        + b_p * out_p * jnp.dtype(jnp.float32).itemsize
    )

    y_p = pl.pallas_call(
        _mlp_kernel,
        out_shape=jax.ShapeDtypeStruct((b_p, out_p), jnp.float32),
        grid_spec=pltpu.PrefetchScalarGridSpec(
            num_scalar_prefetch=0,
            grid=grid,
            in_specs=[
                # activations stream with the grid
                pl.BlockSpec((tile_b, in_p), lambda i: (i, 0)),
                # weights + biases stay resident in VMEM across the whole grid
                pl.BlockSpec((in_p, h_p), lambda i: (0, 0)),
                pl.BlockSpec((1, h_p), lambda i: (0, 0)),
                pl.BlockSpec((h_p, h_p), lambda i: (0, 0)),
                pl.BlockSpec((1, h_p), lambda i: (0, 0)),
                pl.BlockSpec((h_p, out_p), lambda i: (0, 0)),
                pl.BlockSpec((1, out_p), lambda i: (0, 0)),
            ],
            out_specs=pl.BlockSpec((tile_b, out_p), lambda i: (i, 0)),
        ),
        compiler_params=pltpu.CompilerParams(
            dimension_semantics=("parallel",),
        ),
        cost_estimate=pl.CostEstimate(
            flops=flops, transcendentals=0, bytes_accessed=bytes_accessed,
        ),
    )(x_p, w1_p, b1_p, w2_p, b2_p, w3_p, b3_p)

    # Slice off batch / feature padding; return in the caller's dtype.
    return y_p[:B, :out_size].astype(orig_dtype)


def _init_linear(key, fan_in, fan_out):
    """Deterministic init mimicking torch.nn.Linear default U(-1/sqrt(fan_in), +)."""
    kw, kb = jax.random.split(key)
    bound = 1.0 / jnp.sqrt(jnp.float32(fan_in))
    # Stored as (in, out) so the kernel does x @ W (PyTorch stores (out, in)).
    w = jax.random.uniform(kw, (fan_in, fan_out), jnp.float32, -bound, bound)
    b = jax.random.uniform(kb, (1, fan_out), jnp.float32, -bound, bound)
    return w, b


def feedforward_reference(x, w1, b1, w2, b2, w3, b3):
    h = jnp.maximum(x @ w1 + b1, 0.0)
    for _ in range(NLAYERS - 1):
        h = jnp.maximum(h @ w2 + b2, 0.0)
    return h @ w3 + b3


if __name__ == "__main__":
    input_size, hidden_size, output_size = 16, 32, 8
    batch = 2

    key = jax.random.PRNGKey(0)
    kx, k1, k2, k3 = jax.random.split(key, 4)

    x = jax.random.normal(kx, (batch, input_size), jnp.float32)
    w1, b1 = _init_linear(k1, input_size, hidden_size)
    w2, b2 = _init_linear(k2, hidden_size, hidden_size)
    w3, b3 = _init_linear(k3, hidden_size, output_size)

    y = feedforward_pallas(x, w1, b1, w2, b2, w3, b3)
    y = jax.block_until_ready(y)

    y_ref = feedforward_reference(x, w1, b1, w2, b2, w3, b3)
    assert y.shape == (batch, output_size)
    assert jnp.allclose(y, y_ref, atol=1e-5, rtol=1e-5)

    print("KERNEL_OK")
</pallas_src>

<mosaic_0001>
module attributes {stable_mosaic.version = 11 : i64} {
  func.func @_mlp_kernel(%arg0: i32, %arg1: memref<8x128xf32, #tpu.memory_space<vmem>>, %arg2: memref<128x128xf32, #tpu.memory_space<vmem>>, %arg3: memref<1x128xf32, #tpu.memory_space<vmem>>, %arg4: memref<128x128xf32, #tpu.memory_space<vmem>>, %arg5: memref<1x128xf32, #tpu.memory_space<vmem>>, %arg6: memref<128x128xf32, #tpu.memory_space<vmem>>, %arg7: memref<1x128xf32, #tpu.memory_space<vmem>>, %arg8: memref<8x128xf32, #tpu.memory_space<vmem>>) attributes {dimension_semantics = [#tpu.dimension_semantics<parallel>], iteration_bounds = array<i64: 1>, scalar_prefetch = 0 : i64, scratch_operands = 0 : i64, tpu.core_type = #tpu.core_type<tc>, window_params = [{transform_indices = @transform_0, window_bounds = array<i64: 8, 128>}, {pipeline_mode = #tpu.pipeline_mode<synchronous>, transform_indices = @transform_1, window_bounds = array<i64: 128, 128>}, {pipeline_mode = #tpu.pipeline_mode<synchronous>, transform_indices = @transform_2, window_bounds = array<i64: 1, 128>}, {pipeline_mode = #tpu.pipeline_mode<synchronous>, transform_indices = @transform_3, window_bounds = array<i64: 128, 128>}, {pipeline_mode = #tpu.pipeline_mode<synchronous>, transform_indices = @transform_4, window_bounds = array<i64: 1, 128>}, {pipeline_mode = #tpu.pipeline_mode<synchronous>, transform_indices = @transform_5, window_bounds = array<i64: 128, 128>}, {pipeline_mode = #tpu.pipeline_mode<synchronous>, transform_indices = @transform_6, window_bounds = array<i64: 1, 128>}, {transform_indices = @transform_7, window_bounds = array<i64: 8, 128>}]} {
    %c0 = arith.constant 0 : index
    %c0_0 = arith.constant 0 : index
    %0 = vector.load %arg1[%c0, %c0_0] : memref<8x128xf32, #tpu.memory_space<vmem>>, vector<8x128xf32>
    %c0_1 = arith.constant 0 : index
    %c0_2 = arith.constant 0 : index
    %1 = vector.load %arg2[%c0_1, %c0_2] : memref<128x128xf32, #tpu.memory_space<vmem>>, vector<128x128xf32>
    %cst = arith.constant dense<0.000000e+00> : vector<8x128xf32>
    %2 = tpu.matmul %0, %1, %cst {dimension_numbers = #tpu.dot_dimension_numbers<[1], [0], [0], [1], [0, 0, 1, 1], [], []>} : vector<8x128xf32>, vector<128x128xf32>, vector<8x128xf32> -> vector<8x128xf32>
    %c0_3 = arith.constant 0 : index
    %c0_4 = arith.constant 0 : index
    %3 = vector.load %arg3[%c0_3, %c0_4] : memref<1x128xf32, #tpu.memory_space<vmem>>, vector<1x128xf32>
    %4 = vector.broadcast %3 : vector<1x128xf32> to vector<8x128xf32>
    %5 = arith.addf %2, %4 : vector<8x128xf32>
    %cst_5 = arith.constant 0.000000e+00 : f32
    %6 = vector.broadcast %cst_5 : f32 to vector<8x128xf32>
    %7 = arith.maximumf %5, %6 : vector<8x128xf32>
    %c0_6 = arith.constant 0 : index
    %c0_7 = arith.constant 0 : index
    %8 = vector.load %arg4[%c0_6, %c0_7] : memref<128x128xf32, #tpu.memory_space<vmem>>, vector<128x128xf32>
    %c0_8 = arith.constant 0 : index
    %c0_9 = arith.constant 0 : index
    %9 = vector.load %arg5[%c0_8, %c0_9] : memref<1x128xf32, #tpu.memory_space<vmem>>, vector<1x128xf32>
    %10 = vector.shape_cast %9 : vector<1x128xf32> to vector<1x128xf32>
    %11 = vector.broadcast %10 : vector<1x128xf32> to vector<8x128xf32>
    %c0_i32 = arith.constant 0 : i32
    %cst_10 = arith.constant dense<0.000000e+00> : vector<8x128xf32>
    %12 = tpu.matmul %7, %8, %cst_10 {dimension_numbers = #tpu.dot_dimension_numbers<[1], [0], [0], [1], [0, 0, 1, 1], [], []>} : vector<8x128xf32>, vector<128x128xf32>, vector<8x128xf32> -> vector<8x128xf32>
    %13 = arith.addf %12, %11 : vector<8x128xf32>
    %cst_11 = arith.constant 0.000000e+00 : f32
    %14 = vector.broadcast %cst_11 : f32 to vector<8x128xf32>
    %15 = arith.maximumf %13, %14 : vector<8x128xf32>
    %c1_i32 = arith.constant 1 : i32
    %cst_12 = arith.constant dense<0.000000e+00> : vector<8x128xf32>
    %16 = tpu.matmul %15, %8, %cst_12 {dimension_numbers = #tpu.dot_dimension_numbers<[1], [0], [0], [1], [0, 0, 1, 1], [], []>} : vector<8x128xf32>, vector<128x128xf32>, vector<8x128xf32> -> vector<8x128xf32>
    %17 = arith.addf %16, %11 : vector<8x128xf32>
    %cst_13 = arith.constant 0.000000e+00 : f32
    %18 = vector.broadcast %cst_13 : f32 to vector<8x128xf32>
    %19 = arith.maximumf %17, %18 : vector<8x128xf32>
    %c2_i32 = arith.constant 2 : i32
    %cst_14 = arith.constant dense<0.000000e+00> : vector<8x128xf32>
    %20 = tpu.matmul %19, %8, %cst_14 {dimension_numbers = #tpu.dot_dimension_numbers<[1], [0], [0], [1], [0, 0, 1, 1], [], []>} : vector<8x128xf32>, vector<128x128xf32>, vector<8x128xf32> -> vector<8x128xf32>
    %21 = arith.addf %20, %11 : vector<8x128xf32>
    %cst_15 = arith.constant 0.000000e+00 : f32
    %22 = vector.broadcast %cst_15 : f32 to vector<8x128xf32>
    %23 = arith.maximumf %21, %22 : vector<8x128xf32>
    %c3_i32 = arith.constant 3 : i32
    %cst_16 = arith.constant dense<0.000000e+00> : vector<8x128xf32>
    %24 = tpu.matmul %23, %8, %cst_16 {dimension_numbers = #tpu.dot_dimension_numbers<[1], [0], [0], [1], [0, 0, 1, 1], [], []>} : vector<8x128xf32>, vector<128x128xf32>, vector<8x128xf32> -> vector<8x128xf32>
    %25 = arith.addf %24, %11 : vector<8x128xf32>
    %cst_17 = arith.constant 0.000000e+00 : f32
    %26 = vector.broadcast %cst_17 : f32 to vector<8x128xf32>
    %27 = arith.maximumf %25, %26 : vector<8x128xf32>
    %c4_i32 = arith.constant 4 : i32
    %cst_18 = arith.constant dense<0.000000e+00> : vector<8x128xf32>
    %28 = tpu.matmul %27, %8, %cst_18 {dimension_numbers = #tpu.dot_dimension_numbers<[1], [0], [0], [1], [0, 0, 1, 1], [], []>} : vector<8x128xf32>, vector<128x128xf32>, vector<8x128xf32> -> vector<8x128xf32>
    %29 = arith.addf %28, %11 : vector<8x128xf32>
    %cst_19 = arith.constant 0.000000e+00 : f32
    %30 = vector.broadcast %cst_19 : f32 to vector<8x128xf32>
    %31 = arith.maximumf %29, %30 : vector<8x128xf32>
    %c0_20 = arith.constant 0 : index
    %c0_21 = arith.constant 0 : index
    %32 = vector.load %arg6[%c0_20, %c0_21] : memref<128x128xf32, #tpu.memory_space<vmem>>, vector<128x128xf32>
    %cst_22 = arith.constant dense<0.000000e+00> : vector<8x128xf32>
    %33 = tpu.matmul %31, %32, %cst_22 {dimension_numbers = #tpu.dot_dimension_numbers<[1], [0], [0], [1], [0, 0, 1, 1], [], []>} : vector<8x128xf32>, vector<128x128xf32>, vector<8x128xf32> -> vector<8x128xf32>
    %c0_23 = arith.constant 0 : index
    %c0_24 = arith.constant 0 : index
    %34 = vector.load %arg7[%c0_23, %c0_24] : memref<1x128xf32, #tpu.memory_space<vmem>>, vector<1x128xf32>
    %35 = vector.broadcast %34 : vector<1x128xf32> to vector<8x128xf32>
    %36 = arith.addf %33, %35 : vector<8x128xf32>
    %c0_25 = arith.constant 0 : index
    %c0_26 = arith.constant 0 : index
    %37 = vector.load %arg8[%c0_25, %c0_26] : memref<8x128xf32, #tpu.memory_space<vmem>>, vector<8x128xf32>
    tpu.vector_store %arg8[%c0_25, %c0_26], %36 {strides = array<i32>} : memref<8x128xf32, #tpu.memory_space<vmem>>, vector<8x128xf32>,
    return
  }
  func.func @transform_0(%arg0: i32) -> (i32, i32) {
    %c0_i32 = arith.constant 0 : i32
    %c0_i32_0 = arith.constant 0 : i32
    return %arg0, %c0_i32 : i32, i32
  }
  func.func @transform_1(%arg0: i32) -> (i32, i32) {
    %c0_i32 = arith.constant 0 : i32
    %c0_i32_0 = arith.constant 0 : i32
    %c0_i32_1 = arith.constant 0 : i32
    return %c0_i32, %c0_i32_0 : i32, i32
  }
  func.func @transform_2(%arg0: i32) -> (i32, i32) {
    %c0_i32 = arith.constant 0 : i32
    %c0_i32_0 = arith.constant 0 : i32
    %c0_i32_1 = arith.constant 0 : i32
    return %c0_i32, %c0_i32_0 : i32, i32
  }
  func.func @transform_3(%arg0: i32) -> (i32, i32) {
    %c0_i32 = arith.constant 0 : i32
    %c0_i32_0 = arith.constant 0 : i32
    %c0_i32_1 = arith.constant 0 : i32
    return %c0_i32, %c0_i32_0 : i32, i32
  }
  func.func @transform_4(%arg0: i32) -> (i32, i32) {
    %c0_i32 = arith.constant 0 : i32
    %c0_i32_0 = arith.constant 0 : i32
    %c0_i32_1 = arith.constant 0 : i32
    return %c0_i32, %c0_i32_0 : i32, i32
  }
  func.func @transform_5(%arg0: i32) -> (i32, i32) {
    %c0_i32 = arith.constant 0 : i32
    %c0_i32_0 = arith.constant 0 : i32
    %c0_i32_1 = arith.constant 0 : i32
    return %c0_i32, %c0_i32_0 : i32, i32
  }
  func.func @transform_6(%arg0: i32) -> (i32, i32) {
    %c0_i32 = arith.constant 0 : i32
    %c0_i32_0 = arith.constant 0 : i32
    %c0_i32_1 = arith.constant 0 : i32
    return %c0_i32, %c0_i32_0 : i32, i32
  }
  func.func @transform_7(%arg0: i32) -> (i32, i32) {
    %c0_i32 = arith.constant 0 : i32
    %c0_i32_0 = arith.constant 0 : i32
    return %arg0, %c0_i32 : i32, i32
  }
}

</mosaic_0001>

<llo_original>
// kernel: tpu_custom_call.1
$region0: #{tpu_custom_call.1}
  #allocation0 [shape = 'u32[]', space=smem, size = 0x4, offset = 0x4, fixed_abs, tag = 'smem constant byte address 0x4 - core index']
  #allocation1 [shape = 'u32[144,128]{1,0:T(1,128)}', space=vmem, size = 0x12000, scoped, tag = 'internal scratch']
  %s0 = inlined_call_operand.hbm [shape: f32[8,128], index: 0, kind: input, shape index: {}]
  %s1 = inlined_call_operand.hbm [shape: f32[128,128], index: 1, kind: input, shape index: {}]
  %s2 = inlined_call_operand.vmem [shape: f32[1,128], index: 2, kind: input, shape index: {}]
  %s3 = inlined_call_operand.hbm [shape: f32[128,128], index: 3, kind: input, shape index: {}]
  %s4 = inlined_call_operand.vmem [shape: f32[1,128], index: 4, kind: input, shape index: {}]
  %s5 = inlined_call_operand.hbm [shape: f32[128,128], index: 5, kind: input, shape index: {}]
  %s6 = inlined_call_operand.vmem [shape: f32[1,128], index: 6, kind: input, shape index: {}]
  %s7 = inlined_call_operand.hbm [shape: f32[8,128], index: 7, kind: output, shape index: {}]
  %s8 = sld [smem:[#allocation0]]
  $region54: #{tpu_custom_call.1} parent=0
    _
  %s10 = ssub.s32 1, %s8
  %s11 = scalar_select 0, %s10, %s8
  $region1: #{tpu_custom_call.1} parent=0
    #allocation2 [shape = 'u8[4096]{0}', space=vmem, size = 0x1000, scoped, tag = 'input window, operand 0, single buffered']
    #allocation3 [shape = 's32[1]{0}', space=sflag, size = 0x4, scoped, tag = 'scoped memory for tpu_custom_call.1']
    #allocation4 [shape = 's32[1]{0}', space=sflag, size = 0x4, scoped, tag = 'scoped memory for tpu_custom_call.1']
    #allocation5 [shape = 'u8[65536]{0}', space=vmem, size = 0x10000, scoped, tag = 'input window, operand 1, single buffered']
    #allocation6 [shape = 's32[1]{0}', space=sflag, size = 0x4, scoped, tag = 'scoped memory for tpu_custom_call.1']
    #allocation7 [shape = 'u8[65536]{0}', space=vmem, size = 0x10000, scoped, tag = 'input window, operand 3, single buffered']
    #allocation8 [shape = 'u8[65536]{0}', space=vmem, size = 0x10000, scoped, tag = 'input window, operand 5, single buffered']
    #allocation9 [shape = 's32[1]{0}', space=sflag, size = 0x4, scoped, tag = 'scoped memory for tpu_custom_call.1']
    #allocation10 [shape = 'u8[4096]{0}', space=vmem, size = 0x1000, scoped, tag = 'output window, operand 0, single buffered']
    %12 = vsyncpa [#allocation3], 0
    %13 = vsyncpa [#allocation6], 0
    %14 = vsyncpa [#allocation9], 0
    %15 = vsyncpa [#allocation4], 0
    // Predicated region
    $region2: #{tpu_custom_call.1} parent=1 // pred_check
      _
    $region3: #{tpu_custom_call.1} parent=1 // pred_check_branch
      %17 = sbr.rel (0) target = $region5
    $region4: #{tpu_custom_call.1} parent=1 // pred_region
      %s19 = ssub.s32 128, 128
      %20 = vsyncadd [#allocation3], %s19
      %s22 = sshll.u32 [#allocation2], 4
      %s23 = int_to_ptr.vmem [resolvable:$true] %s22
      %25 = dma.hbm_to_vmem [thread:$0]  %s0, 128, %s23, [#allocation3]
    $region5: #{tpu_custom_call.1} parent=1 // pred_fallthru
      _
    // Predicated region
    $region6: #{tpu_custom_call.1} parent=1 // pred_check
      _
    $region7: #{tpu_custom_call.1} parent=1 // pred_check_branch
      %27 = sbr.rel (0) target = $region9
    $region8: #{tpu_custom_call.1} parent=1 // pred_region
      %s29 = ssub.s32 2048, 2048
      %30 = vsyncadd [#allocation6], %s29
      %s31 = sshll.u32 [#allocation5], 4
      %s32 = int_to_ptr.vmem [resolvable:$true] %s31
      %37 = dma.hbm_to_vmem [thread:$0]  %s1, 2048, %s32, [#allocation6], 128, 128, 8
    $region9: #{tpu_custom_call.1} parent=1 // pred_fallthru
      _
    // Predicated region
    $region10: #{tpu_custom_call.1} parent=1 // pred_check
      _
    $region11: #{tpu_custom_call.1} parent=1 // pred_check_branch
      %39 = sbr.rel (0) target = $region13
    $region12: #{tpu_custom_call.1} parent=1 // pred_region
      _
    $region13: #{tpu_custom_call.1} parent=1 // pred_fallthru
      _
    // Predicated region
    $region14: #{tpu_custom_call.1} parent=1 // pred_check
      _
    $region15: #{tpu_custom_call.1} parent=1 // pred_check_branch
      %41 = sbr.rel (0) target = $region17
    $region16: #{tpu_custom_call.1} parent=1 // pred_region
      %s43 = ssub.s32 2048, 2048
      %44 = vsyncadd [#allocation6], %s43
      %s45 = sshll.u32 [#allocation7], 4
      %s46 = int_to_ptr.vmem [resolvable:$true] %s45
      %51 = dma.hbm_to_vmem [thread:$0]  %s3, 2048, %s46, [#allocation6], 128, 128, 8
    $region17: #{tpu_custom_call.1} parent=1 // pred_fallthru
      _
    // Predicated region
    $region18: #{tpu_custom_call.1} parent=1 // pred_check
      _
    $region19: #{tpu_custom_call.1} parent=1 // pred_check_branch
      %53 = sbr.rel (0) target = $region21
    $region20: #{tpu_custom_call.1} parent=1 // pred_region
      _
    $region21: #{tpu_custom_call.1} parent=1 // pred_fallthru
      _
    // Predicated region
    $region22: #{tpu_custom_call.1} parent=1 // pred_check
      _
    $region23: #{tpu_custom_call.1} parent=1 // pred_check_branch
      %55 = sbr.rel (0) target = $region25
    $region24: #{tpu_custom_call.1} parent=1 // pred_region
      %s57 = ssub.s32 2048, 2048
      %58 = vsyncadd [#allocation9], %s57
      %s59 = sshll.u32 [#allocation8], 4
      %s60 = int_to_ptr.vmem [resolvable:$true] %s59
      %65 = dma.hbm_to_vmem [thread:$0]  %s5, 2048, %s60, [#allocation9], 128, 128, 8
    $region25: #{tpu_custom_call.1} parent=1 // pred_fallthru
      _
    // Predicated region
    $region26: #{tpu_custom_call.1} parent=1 // pred_check
      _
    $region27: #{tpu_custom_call.1} parent=1 // pred_check_branch
      %67 = sbr.rel (0) target = $region29
    $region28: #{tpu_custom_call.1} parent=1 // pred_region
      _
    $region29: #{tpu_custom_call.1} parent=1 // pred_fallthru
      _
    // Predicated region
    $region30: #{tpu_custom_call.1} parent=1 // pred_check
      _
    $region31: #{tpu_custom_call.1} parent=1 // pred_check_branch
      %69 = sbr.rel (0) target = $region33
    $region32: #{tpu_custom_call.1} parent=1 // pred_region
      %70 = dma.done [#allocation3], 128
    $region33: #{tpu_custom_call.1} parent=1 // pred_fallthru
      _
    // Predicated region
    $region34: #{tpu_custom_call.1} parent=1 // pred_check
      _
    $region35: #{tpu_custom_call.1} parent=1 // pred_check_branch
      %72 = sbr.rel (0) target = $region37
    $region36: #{tpu_custom_call.1} parent=1 // pred_region
      %73 = dma.done [#allocation6], 2048
    $region37: #{tpu_custom_call.1} parent=1 // pred_fallthru
      _
    // Predicated region
    $region38: #{tpu_custom_call.1} parent=1 // pred_check
      _
    $region39: #{tpu_custom_call.1} parent=1 // pred_check_branch
      %75 = sbr.rel (0) target = $region41
    $region40: #{tpu_custom_call.1} parent=1 // pred_region
      %76 = dma.done [#allocation6], 2048
    $region41: #{tpu_custom_call.1} parent=1 // pred_fallthru
      _
    // Predicated region
    $region42: #{tpu_custom_call.1} parent=1 // pred_check
      _
    $region43: #{tpu_custom_call.1} parent=1 // pred_check_branch
      %78 = sbr.rel (0) target = $region45
    $region44: #{tpu_custom_call.1} parent=1 // pred_region
      %79 = dma.done [#allocation9], 2048
    $region45: #{tpu_custom_call.1} parent=1 // pred_fallthru
      _
    %v80 = vld [vmem:[#allocation2] sm:$0xff]
    %v81 = vld [vmem:[#allocation5] sm:$0xff]
    %v82 = vld [vmem:[#allocation5 + $0x8] sm:$0xff]
    %v83 = vld [vmem:[#allocation5 + $0x10] sm:$0xff]
    %v84 = vld [vmem:[#allocation5 + $0x18] sm:$0xff]
    %v85 = vld [vmem:[#allocation5 + $0x20] sm:$0xff]
    %v86 = vld [vmem:[#allocation5 + $0x28] sm:$0xff]
    %v87 = vld [vmem:[#allocation5 + $0x30] sm:$0xff]
    %v88 = vld [vmem:[#allocation5 + $0x38] sm:$0xff]
    %v89 = vld [vmem:[#allocation5 + $0x40] sm:$0xff]
    %v90 = vld [vmem:[#allocation5 + $0x48] sm:$0xff]
    %v91 = vld [vmem:[#allocation5 + $0x50] sm:$0xff]
    %v92 = vld [vmem:[#allocation5 + $0x58] sm:$0xff]
    %v93 = vld [vmem:[#allocation5 + $0x60] sm:$0xff]
    %v94 = vld [vmem:[#allocation5 + $0x68] sm:$0xff]
    %v95 = vld [vmem:[#allocation5 + $0x70] sm:$0xff]
    %v96 = vld [vmem:[#allocation5 + $0x78] sm:$0xff]
    %v97 = vld [vmem:[%s2] sm:$0x1]
    %v99 = vlaneseq
    %v100 = vshrl.u32 %v99, 7
    %v101 = vsub.s32 0, %v100
    %v102 = vrot.slane %v97, %v101
    %104 = vmatprep.subr.mxu0 0.0
    %105 = vmatpush1.msra.mxu0 %v81
    %106 = vmatprep.subr.mxu0 0.0
    %107 = vmatpush1.msra.mxu0 %v82
    %108 = vmatprep.subr.mxu0 0.0
    %109 = vmatpush1.msra.mxu0 %v83
    %110 = vmatprep.subr.mxu0 0.0
    %111 = vmatpush1.msra.mxu0 %v84
    %112 = vmatprep.subr.mxu0 0.0
    %113 = vmatpush1.msra.mxu0 %v85
    %114 = vmatprep.subr.mxu0 0.0
    %115 = vmatpush1.msra.mxu0 %v86
    %116 = vmatprep.subr.mxu0 0.0
    %117 = vmatpush1.msra.mxu0 %v87
    %118 = vmatprep.subr.mxu0 0.0
    %119 = vmatpush1.msra.mxu0 %v88
    %120 = vmatprep.subr.mxu0 0.0
    %121 = vmatpush1.msra.mxu0 %v89
    %122 = vmatprep.subr.mxu0 0.0
    %123 = vmatpush1.msra.mxu0 %v90
    %124 = vmatprep.subr.mxu0 0.0
    %125 = vmatpush1.msra.mxu0 %v91
    %126 = vmatprep.subr.mxu0 0.0
    %127 = vmatpush1.msra.mxu0 %v92
    %128 = vmatprep.subr.mxu0 0.0
    %129 = vmatpush1.msra.mxu0 %v93
    %130 = vmatprep.subr.mxu0 0.0
    %131 = vmatpush1.msra.mxu0 %v94
    %132 = vmatprep.subr.mxu0 0.0
    %133 = vmatpush1.msra.mxu0 %v95
    %134 = vmatprep.subr.mxu0 0.0
    %135 = vmatpush1.msra.mxu0 %v96
    %136 = vmatprep.subr.mxu0 0.0
    %137 = vmatpush1.msra.mxu0 0.0
    %138 = vmatprep.subr.mxu0 0.0
    %139 = vmatpush1.msra.mxu0 0.0
    %140 = vmatprep.subr.mxu0 0.0
    %141 = vmatpush1.msra.mxu0 0.0
    %142 = vmatprep.subr.mxu0 0.0
    %143 = vmatpush1.msra.mxu0 0.0
    %144 = vmatprep.subr.mxu0 0.0
    %145 = vmatpush1.msra.mxu0 0.0
    %146 = vmatprep.subr.mxu0 0.0
    %147 = vmatpush1.msra.mxu0 0.0
    %148 = vmatprep.subr.mxu0 0.0
    %149 = vmatpush1.msra.mxu0 0.0
    %150 = vmatprep.subr.mxu0 0.0
    %151 = vmatpush1.msra.mxu0 0.0
    %152 = vmatprep.subr.mxu0 0.0
    %153 = vmatpush1.msra.mxu0 0.0
    %154 = vmatprep.subr.mxu0 0.0
    %155 = vmatpush1.msra.mxu0 0.0
    %156 = vmatprep.subr.mxu0 0.0
    %157 = vmatpush1.msra.mxu0 0.0
    %158 = vmatprep.subr.mxu0 0.0
    %159 = vmatpush1.msra.mxu0 0.0
    %160 = vmatprep.subr.mxu0 0.0
    %161 = vmatpush1.msra.mxu0 0.0
    %162 = vmatprep.subr.mxu0 0.0
    %163 = vmatpush1.msra.mxu0 0.0
    %164 = vmatprep.subr.mxu0 0.0
    %165 = vmatpush1.msra.mxu0 0.0
    %166 = vmatprep.subr.mxu0 0.0
    %167 = vmatpush1.msra.mxu0 0.0
    %168 = vmatprep.mubr.f32.mxu0 0.0
    %169 = vmatmul.mubr.f32.gmra.mrb[0].mxu0 %v80
    %v170 = vpop.f32.mrb[0].mxu0
    %v171 = vadd.f32 %v102, %v170
    %v172 = vpop.f32.mrb[0].mxu0
    %173 = vdwg.mxu0
    %v174 = vmax.f32 %v171, 0.0
    %v175 = vld [vmem:[#allocation7] sm:$0xff]
    %v176 = vld [vmem:[#allocation7 + $0x8] sm:$0xff]
    %v177 = vld [vmem:[#allocation7 + $0x10] sm:$0xff]
    %v178 = vld [vmem:[#allocation7 + $0x18] sm:$0xff]
    %v179 = vld [vmem:[#allocation7 + $0x20] sm:$0xff]
    %v180 = vld [vmem:[#allocation7 + $0x28] sm:$0xff]
    %v181 = vld [vmem:[#allocation7 + $0x30] sm:$0xff]
    %v182 = vld [vmem:[#allocation7 + $0x38] sm:$0xff]
    %v183 = vld [vmem:[#allocation7 + $0x40] sm:$0xff]
    %v184 = vld [vmem:[#allocation7 + $0x48] sm:$0xff]
    %v185 = vld [vmem:[#allocation7 + $0x50] sm:$0xff]
    %v186 = vld [vmem:[#allocation7 + $0x58] sm:$0xff]
    %v187 = vld [vmem:[#allocation7 + $0x60] sm:$0xff]
    %v188 = vld [vmem:[#allocation7 + $0x68] sm:$0xff]
    %v189 = vld [vmem:[#allocation7 + $0x70] sm:$0xff]
    %v190 = vld [vmem:[#allocation7 + $0x78] sm:$0xff]
    %v191 = vld [vmem:[%s4] sm:$0x1]
    %v193 = vlaneseq
    %v194 = vshrl.u32 %v193, 7
    %v195 = vsub.s32 0, %v194
    %v196 = vrot.slane %v191, %v195
    %198 = vmatprep.subr.mxu0 0.0
    %199 = vmatpush1.msra.mxu0 %v175
    %200 = vmatprep.subr.mxu0 0.0
    %201 = vmatpush1.msra.mxu0 %v176
    %202 = vmatprep.subr.mxu0 0.0
    %203 = vmatpush1.msra.mxu0 %v177
    %204 = vmatprep.subr.mxu0 0.0
    %205 = vmatpush1.msra.mxu0 %v178
    %206 = vmatprep.subr.mxu0 0.0
    %207 = vmatpush1.msra.mxu0 %v179
    %208 = vmatprep.subr.mxu0 0.0
    %209 = vmatpush1.msra.mxu0 %v180
    %210 = vmatprep.subr.mxu0 0.0
    %211 = vmatpush1.msra.mxu0 %v181
    %212 = vmatprep.subr.mxu0 0.0
    %213 = vmatpush1.msra.mxu0 %v182
    %214 = vmatprep.subr.mxu0 0.0
    %215 = vmatpush1.msra.mxu0 %v183
    %216 = vmatprep.subr.mxu0 0.0
    %217 = vmatpush1.msra.mxu0 %v184
    %218 = vmatprep.subr.mxu0 0.0
    %219 = vmatpush1.msra.mxu0 %v185
    %220 = vmatprep.subr.mxu0 0.0
    %221 = vmatpush1.msra.mxu0 %v186
    %222 = vmatprep.subr.mxu0 0.0
    %223 = vmatpush1.msra.mxu0 %v187
    %224 = vmatprep.subr.mxu0 0.0
    %225 = vmatpush1.msra.mxu0 %v188
    %226 = vmatprep.subr.mxu0 0.0
    %227 = vmatpush1.msra.mxu0 %v189
    %228 = vmatprep.subr.mxu0 0.0
    %229 = vmatpush1.msra.mxu0 %v190
    %230 = vmatprep.subr.mxu0 0.0
    %231 = vmatpush1.msra.mxu0 0.0
    %232 = vmatprep.subr.mxu0 0.0
    %233 = vmatpush1.msra.mxu0 0.0
    %234 = vmatprep.subr.mxu0 0.0
    %235 = vmatpush1.msra.mxu0 0.0
    %236 = vmatprep.subr.mxu0 0.0
    %237 = vmatpush1.msra.mxu0 0.0
    %238 = vmatprep.subr.mxu0 0.0
    %239 = vmatpush1.msra.mxu0 0.0
    %240 = vmatprep.subr.mxu0 0.0
    %241 = vmatpush1.msra.mxu0 0.0
    %242 = vmatprep.subr.mxu0 0.0
    %243 = vmatpush1.msra.mxu0 0.0
    %244 = vmatprep.subr.mxu0 0.0
    %245 = vmatpush1.msra.mxu0 0.0
    %246 = vmatprep.subr.mxu0 0.0
    %247 = vmatpush1.msra.mxu0 0.0
    %248 = vmatprep.subr.mxu0 0.0
    %249 = vmatpush1.msra.mxu0 0.0
    %250 = vmatprep.subr.mxu0 0.0
    %251 = vmatpush1.msra.mxu0 0.0
    %252 = vmatprep.subr.mxu0 0.0
    %253 = vmatpush1.msra.mxu0 0.0
    %254 = vmatprep.subr.mxu0 0.0
    %255 = vmatpush1.msra.mxu0 0.0
    %256 = vmatprep.subr.mxu0 0.0
    %257 = vmatpush1.msra.mxu0 0.0
    %258 = vmatprep.subr.mxu0 0.0
    %259 = vmatpush1.msra.mxu0 0.0
    %260 = vmatprep.subr.mxu0 0.0
    %261 = vmatpush1.msra.mxu0 0.0
    %262 = vmatprep.mubr.f32.mxu0 0.0
    %263 = vmatmul.mubr.f32.gmra.mrb[0].mxu0 %v174
    %v264 = vpop.f32.mrb[0].mxu0
    %v265 = vadd.f32 %v196, %v264
    %v266 = vpop.f32.mrb[0].mxu0
    %267 = vdwg.mxu0
    %v268 = vmax.f32 %v265, 0.0
    %269 = vmatprep.subr.mxu0 0.0
    %270 = vmatpush1.msra.mxu0 %v175
    %271 = vmatprep.subr.mxu0 0.0
    %272 = vmatpush1.msra.mxu0 %v176
    %273 = vmatprep.subr.mxu0 0.0
    %274 = vmatpush1.msra.mxu0 %v177
    %275 = vmatprep.subr.mxu0 0.0
    %276 = vmatpush1.msra.mxu0 %v178
    %277 = vmatprep.subr.mxu0 0.0
    %278 = vmatpush1.msra.mxu0 %v179
    %279 = vmatprep.subr.mxu0 0.0
    %280 = vmatpush1.msra.mxu0 %v180
    %281 = vmatprep.subr.mxu0 0.0
    %282 = vmatpush1.msra.mxu0 %v181
    %283 = vmatprep.subr.mxu0 0.0
    %284 = vmatpush1.msra.mxu0 %v182
    %285 = vmatprep.subr.mxu0 0.0
    %286 = vmatpush1.msra.mxu0 %v183
    %287 = vmatprep.subr.mxu0 0.0
    %288 = vmatpush1.msra.mxu0 %v184
    %289 = vmatprep.subr.mxu0 0.0
    %290 = vmatpush1.msra.mxu0 %v185
    %291 = vmatprep.subr.mxu0 0.0
    %292 = vmatpush1.msra.mxu0 %v186
    %293 = vmatprep.subr.mxu0 0.0
    %294 = vmatpush1.msra.mxu0 %v187
    %295 = vmatprep.subr.mxu0 0.0
    %296 = vmatpush1.msra.mxu0 %v188
    %297 = vmatprep.subr.mxu0 0.0
    %298 = vmatpush1.msra.mxu0 %v189
    %299 = vmatprep.subr.mxu0 0.0
    %300 = vmatpush1.msra.mxu0 %v190
    %301 = vmatprep.subr.mxu0 0.0
    %302 = vmatpush1.msra.mxu0 0.0
    %303 = vmatprep.subr.mxu0 0.0
    %304 = vmatpush1.msra.mxu0 0.0
    %305 = vmatprep.subr.mxu0 0.0
    %306 = vmatpush1.msra.mxu0 0.0
    %307 = vmatprep.subr.mxu0 0.0
    %308 = vmatpush1.msra.mxu0 0.0
    %309 = vmatprep.subr.mxu0 0.0
    %310 = vmatpush1.msra.mxu0 0.0
    %311 = vmatprep.subr.mxu0 0.0
    %312 = vmatpush1.msra.mxu0 0.0
    %313 = vmatprep.subr.mxu0 0.0
    %314 = vmatpush1.msra.mxu0 0.0
    %315 = vmatprep.subr.mxu0 0.0
    %316 = vmatpush1.msra.mxu0 0.0
    %317 = vmatprep.subr.mxu0 0.0
    %318 = vmatpush1.msra.mxu0 0.0
    %319 = vmatprep.subr.mxu0 0.0
    %320 = vmatpush1.msra.mxu0 0.0
    %321 = vmatprep.subr.mxu0 0.0
    %322 = vmatpush1.msra.mxu0 0.0
    %323 = vmatprep.subr.mxu0 0.0
    %324 = vmatpush1.msra.mxu0 0.0
    %325 = vmatprep.subr.mxu0 0.0
    %326 = vmatpush1.msra.mxu0 0.0
    %327 = vmatprep.subr.mxu0 0.0
    %328 = vmatpush1.msra.mxu0 0.0
    %329 = vmatprep.subr.mxu0 0.0
    %330 = vmatpush1.msra.mxu0 0.0
    %331 = vmatprep.subr.mxu0 0.0
    %332 = vmatpush1.msra.mxu0 0.0
    %333 = vmatprep.mubr.f32.mxu0 0.0
    %334 = vmatmul.mubr.f32.gmra.mrb[0].mxu0 %v268
    %v335 = vpop.f32.mrb[0].mxu0
    %v336 = vadd.f32 %v196, %v335
    %v337 = vpop.f32.mrb[0].mxu0
    %338 = vdwg.mxu0
    %v339 = vmax.f32 %v336, 0.0
    %340 = vmatprep.subr.mxu0 0.0
    %341 = vmatpush1.msra.mxu0 %v175
    %342 = vmatprep.subr.mxu0 0.0
    %343 = vmatpush1.msra.mxu0 %v176
    %344 = vmatprep.subr.mxu0 0.0
    %345 = vmatpush1.msra.mxu0 %v177
    %346 = vmatprep.subr.mxu0 0.0
    %347 = vmatpush1.msra.mxu0 %v178
    %348 = vmatprep.subr.mxu0 0.0
    %349 = vmatpush1.msra.mxu0 %v179
    %350 = vmatprep.subr.mxu0 0.0
    %351 = vmatpush1.msra.mxu0 %v180
    %352 = vmatprep.subr.mxu0 0.0
    %353 = vmatpush1.msra.mxu0 %v181
    %354 = vmatprep.subr.mxu0 0.0
    %355 = vmatpush1.msra.mxu0 %v182
    %356 = vmatprep.subr.mxu0 0.0
    %357 = vmatpush1.msra.mxu0 %v183
    %358 = vmatprep.subr.mxu0 0.0
    %359 = vmatpush1.msra.mxu0 %v184
    %360 = vmatprep.subr.mxu0 0.0
    %361 = vmatpush1.msra.mxu0 %v185
    %362 = vmatprep.subr.mxu0 0.0
    %363 = vmatpush1.msra.mxu0 %v186
    %364 = vmatprep.subr.mxu0 0.0
    %365 = vmatpush1.msra.mxu0 %v187
    %366 = vmatprep.subr.mxu0 0.0
    %367 = vmatpush1.msra.mxu0 %v188
    %368 = vmatprep.subr.mxu0 0.0
    %369 = vmatpush1.msra.mxu0 %v189
    %370 = vmatprep.subr.mxu0 0.0
    %371 = vmatpush1.msra.mxu0 %v190
    %372 = vmatprep.subr.mxu0 0.0
    %373 = vmatpush1.msra.mxu0 0.0
    %374 = vmatprep.subr.mxu0 0.0
    %375 = vmatpush1.msra.mxu0 0.0
    %376 = vmatprep.subr.mxu0 0.0
    %377 = vmatpush1.msra.mxu0 0.0
    %378 = vmatprep.subr.mxu0 0.0
    %379 = vmatpush1.msra.mxu0 0.0
    %380 = vmatprep.subr.mxu0 0.0
    %381 = vmatpush1.msra.mxu0 0.0
    %382 = vmatprep.subr.mxu0 0.0
    %383 = vmatpush1.msra.mxu0 0.0
    %384 = vmatprep.subr.mxu0 0.0
    %385 = vmatpush1.msra.mxu0 0.0
    %386 = vmatprep.subr.mxu0 0.0
    %387 = vmatpush1.msra.mxu0 0.0
    %388 = vmatprep.subr.mxu0 0.0
    %389 = vmatpush1.msra.mxu0 0.0
    %390 = vmatprep.subr.mxu0 0.0
    %391 = vmatpush1.msra.mxu0 0.0
    %392 = vmatprep.subr.mxu0 0.0
    %393 = vmatpush1.msra.mxu0 0.0
    %394 = vmatprep.subr.mxu0 0.0
    %395 = vmatpush1.msra.mxu0 0.0
    %396 = vmatprep.subr.mxu0 0.0
    %397 = vmatpush1.msra.mxu0 0.0
    %398 = vmatprep.subr.mxu0 0.0
    %399 = vmatpush1.msra.mxu0 0.0
    %400 = vmatprep.subr.mxu0 0.0
    %401 = vmatpush1.msra.mxu0 0.0
    %402 = vmatprep.subr.mxu0 0.0
    %403 = vmatpush1.msra.mxu0 0.0
    %404 = vmatprep.mubr.f32.mxu0 0.0
    %405 = vmatmul.mubr.f32.gmra.mrb[0].mxu0 %v339
    %v406 = vpop.f32.mrb[0].mxu0
    %v407 = vadd.f32 %v196, %v406
    %v408 = vpop.f32.mrb[0].mxu0
    %409 = vdwg.mxu0
    %v410 = vmax.f32 %v407, 0.0
    %411 = vmatprep.subr.mxu0 0.0
    %412 = vmatpush1.msra.mxu0 %v175
    %413 = vmatprep.subr.mxu0 0.0
    %414 = vmatpush1.msra.mxu0 %v176
    %415 = vmatprep.subr.mxu0 0.0
    %416 = vmatpush1.msra.mxu0 %v177
    %417 = vmatprep.subr.mxu0 0.0
    %418 = vmatpush1.msra.mxu0 %v178
    %419 = vmatprep.subr.mxu0 0.0
    %420 = vmatpush1.msra.mxu0 %v179
    %421 = vmatprep.subr.mxu0 0.0
    %422 = vmatpush1.msra.mxu0 %v180
    %423 = vmatprep.subr.mxu0 0.0
    %424 = vmatpush1.msra.mxu0 %v181
    %425 = vmatprep.subr.mxu0 0.0
    %426 = vmatpush1.msra.mxu0 %v182
    %427 = vmatprep.subr.mxu0 0.0
    %428 = vmatpush1.msra.mxu0 %v183
    %429 = vmatprep.subr.mxu0 0.0
    %430 = vmatpush1.msra.mxu0 %v184
    %431 = vmatprep.subr.mxu0 0.0
    %432 = vmatpush1.msra.mxu0 %v185
    %433 = vmatprep.subr.mxu0 0.0
    %434 = vmatpush1.msra.mxu0 %v186
    %435 = vmatprep.subr.mxu0 0.0
    %436 = vmatpush1.msra.mxu0 %v187
    %437 = vmatprep.subr.mxu0 0.0
    %438 = vmatpush1.msra.mxu0 %v188
    %439 = vmatprep.subr.mxu0 0.0
    %440 = vmatpush1.msra.mxu0 %v189
    %441 = vmatprep.subr.mxu0 0.0
    %442 = vmatpush1.msra.mxu0 %v190
    %443 = vmatprep.subr.mxu0 0.0
    %444 = vmatpush1.msra.mxu0 0.0
    %445 = vmatprep.subr.mxu0 0.0
    %446 = vmatpush1.msra.mxu0 0.0
    %447 = vmatprep.subr.mxu0 0.0
    %448 = vmatpush1.msra.mxu0 0.0
    %449 = vmatprep.subr.mxu0 0.0
    %450 = vmatpush1.msra.mxu0 0.0
    %451 = vmatprep.subr.mxu0 0.0
    %452 = vmatpush1.msra.mxu0 0.0
    %453 = vmatprep.subr.mxu0 0.0
    %454 = vmatpush1.msra.mxu0 0.0
    %455 = vmatprep.subr.mxu0 0.0
    %456 = vmatpush1.msra.mxu0 0.0
    %457 = vmatprep.subr.mxu0 0.0
    %458 = vmatpush1.msra.mxu0 0.0
    %459 = vmatprep.subr.mxu0 0.0
    %460 = vmatpush1.msra.mxu0 0.0
    %461 = vmatprep.subr.mxu0 0.0
    %462 = vmatpush1.msra.mxu0 0.0
    %463 = vmatprep.subr.mxu0 0.0
    %464 = vmatpush1.msra.mxu0 0.0
    %465 = vmatprep.subr.mxu0 0.0
    %466 = vmatpush1.msra.mxu0 0.0
    %467 = vmatprep.subr.mxu0 0.0
    %468 = vmatpush1.msra.mxu0 0.0
    %469 = vmatprep.subr.mxu0 0.0
    %470 = vmatpush1.msra.mxu0 0.0
    %471 = vmatprep.subr.mxu0 0.0
    %472 = vmatpush1.msra.mxu0 0.0
    %473 = vmatprep.subr.mxu0 0.0
    %474 = vmatpush1.msra.mxu0 0.0
    %475 = vmatprep.mubr.f32.mxu0 0.0
    %476 = vmatmul.mubr.f32.gmra.mrb[0].mxu0 %v410
    %v477 = vpop.f32.mrb[0].mxu0
    %v478 = vadd.f32 %v196, %v477
    %v479 = vpop.f32.mrb[0].mxu0
    %480 = vdwg.mxu0
    %v481 = vmax.f32 %v478, 0.0
    %482 = vmatprep.subr.mxu0 0.0
    %483 = vmatpush1.msra.mxu0 %v175
    %484 = vmatprep.subr.mxu0 0.0
    %485 = vmatpush1.msra.mxu0 %v176
    %486 = vmatprep.subr.mxu0 0.0
    %487 = vmatpush1.msra.mxu0 %v177
    %488 = vmatprep.subr.mxu0 0.0
    %489 = vmatpush1.msra.mxu0 %v178
    %490 = vmatprep.subr.mxu0 0.0
    %491 = vmatpush1.msra.mxu0 %v179
    %492 = vmatprep.subr.mxu0 0.0
    %493 = vmatpush1.msra.mxu0 %v180
    %494 = vmatprep.subr.mxu0 0.0
    %495 = vmatpush1.msra.mxu0 %v181
    %496 = vmatprep.subr.mxu0 0.0
    %497 = vmatpush1.msra.mxu0 %v182
    %498 = vmatprep.subr.mxu0 0.0
    %499 = vmatpush1.msra.mxu0 %v183
    %500 = vmatprep.subr.mxu0 0.0
    %501 = vmatpush1.msra.mxu0 %v184
    %502 = vmatprep.subr.mxu0 0.0
    %503 = vmatpush1.msra.mxu0 %v185
    %504 = vmatprep.subr.mxu0 0.0
    %505 = vmatpush1.msra.mxu0 %v186
    %506 = vmatprep.subr.mxu0 0.0
    %507 = vmatpush1.msra.mxu0 %v187
    %508 = vmatprep.subr.mxu0 0.0
    %509 = vmatpush1.msra.mxu0 %v188
    %510 = vmatprep.subr.mxu0 0.0
    %511 = vmatpush1.msra.mxu0 %v189
    %512 = vmatprep.subr.mxu0 0.0
    %513 = vmatpush1.msra.mxu0 %v190
    %514 = vmatprep.subr.mxu0 0.0
    %515 = vmatpush1.msra.mxu0 0.0
    %516 = vmatprep.subr.mxu0 0.0
    %517 = vmatpush1.msra.mxu0 0.0
    %518 = vmatprep.subr.mxu0 0.0
    %519 = vmatpush1.msra.mxu0 0.0
    %520 = vmatprep.subr.mxu0 0.0
    %521 = vmatpush1.msra.mxu0 0.0
    %522 = vmatprep.subr.mxu0 0.0
    %523 = vmatpush1.msra.mxu0 0.0
    %524 = vmatprep.subr.mxu0 0.0
    %525 = vmatpush1.msra.mxu0 0.0
    %526 = vmatprep.subr.mxu0 0.0
    %527 = vmatpush1.msra.mxu0 0.0
    %528 = vmatprep.subr.mxu0 0.0
    %529 = vmatpush1.msra.mxu0 0.0
    %530 = vmatprep.subr.mxu0 0.0
    %531 = vmatpush1.msra.mxu0 0.0
    %532 = vmatprep.subr.mxu0 0.0
    %533 = vmatpush1.msra.mxu0 0.0
    %534 = vmatprep.subr.mxu0 0.0
    %535 = vmatpush1.msra.mxu0 0.0
    %536 = vmatprep.subr.mxu0 0.0
    %537 = vmatpush1.msra.mxu0 0.0
    %538 = vmatprep.subr.mxu0 0.0
    %539 = vmatpush1.msra.mxu0 0.0
    %540 = vmatprep.subr.mxu0 0.0
    %541 = vmatpush1.msra.mxu0 0.0
    %542 = vmatprep.subr.mxu0 0.0
    %543 = vmatpush1.msra.mxu0 0.0
    %544 = vmatprep.subr.mxu0 0.0
    %545 = vmatpush1.msra.mxu0 0.0
    %546 = vmatprep.mubr.f32.mxu0 0.0
    %547 = vmatmul.mubr.f32.gmra.mrb[0].mxu0 %v481
    %v548 = vpop.f32.mrb[0].mxu0
    %v549 = vadd.f32 %v196, %v548
    %v550 = vpop.f32.mrb[0].mxu0
    %551 = vdwg.mxu0
    %v552 = vmax.f32 %v549, 0.0
    %v553 = vld [vmem:[#allocation8] sm:$0xff]
    %v554 = vld [vmem:[#allocation8 + $0x8] sm:$0xff]
    %v555 = vld [vmem:[#allocation8 + $0x10] sm:$0xff]
    %v556 = vld [vmem:[#allocation8 + $0x18] sm:$0xff]
    %v557 = vld [vmem:[#allocation8 + $0x20] sm:$0xff]
    %v558 = vld [vmem:[#allocation8 + $0x28] sm:$0xff]
    %v559 = vld [vmem:[#allocation8 + $0x30] sm:$0xff]
    %v560 = vld [vmem:[#allocation8 + $0x38] sm:$0xff]
    %v561 = vld [vmem:[#allocation8 + $0x40] sm:$0xff]
    %v562 = vld [vmem:[#allocation8 + $0x48] sm:$0xff]
    %v563 = vld [vmem:[#allocation8 + $0x50] sm:$0xff]
    %v564 = vld [vmem:[#allocation8 + $0x58] sm:$0xff]
    %v565 = vld [vmem:[#allocation8 + $0x60] sm:$0xff]
    %v566 = vld [vmem:[#allocation8 + $0x68] sm:$0xff]
    %v567 = vld [vmem:[#allocation8 + $0x70] sm:$0xff]
    %v568 = vld [vmem:[#allocation8 + $0x78] sm:$0xff]
    %v569 = vld [vmem:[%s6] sm:$0x1]
    %v571 = vlaneseq
    %v572 = vshrl.u32 %v571, 7
    %v573 = vsub.s32 0, %v572
    %v574 = vrot.slane %v569, %v573
    %576 = vmatprep.subr.mxu0 0.0
    %577 = vmatpush1.msra.mxu0 %v553
    %578 = vmatprep.subr.mxu0 0.0
    %579 = vmatpush1.msra.mxu0 %v554
    %580 = vmatprep.subr.mxu0 0.0
    %581 = vmatpush1.msra.mxu0 %v555
    %582 = vmatprep.subr.mxu0 0.0
    %583 = vmatpush1.msra.mxu0 %v556
    %584 = vmatprep.subr.mxu0 0.0
    %585 = vmatpush1.msra.mxu0 %v557
    %586 = vmatprep.subr.mxu0 0.0
    %587 = vmatpush1.msra.mxu0 %v558
    %588 = vmatprep.subr.mxu0 0.0
    %589 = vmatpush1.msra.mxu0 %v559
    %590 = vmatprep.subr.mxu0 0.0
    %591 = vmatpush1.msra.mxu0 %v560
    %592 = vmatprep.subr.mxu0 0.0
    %593 = vmatpush1.msra.mxu0 %v561
    %594 = vmatprep.subr.mxu0 0.0
    %595 = vmatpush1.msra.mxu0 %v562
    %596 = vmatprep.subr.mxu0 0.0
    %597 = vmatpush1.msra.mxu0 %v563
    %598 = vmatprep.subr.mxu0 0.0
    %599 = vmatpush1.msra.mxu0 %v564
    %600 = vmatprep.subr.mxu0 0.0
    %601 = vmatpush1.msra.mxu0 %v565
    %602 = vmatprep.subr.mxu0 0.0
    %603 = vmatpush1.msra.mxu0 %v566
    %604 = vmatprep.subr.mxu0 0.0
    %605 = vmatpush1.msra.mxu0 %v567
    %606 = vmatprep.subr.mxu0 0.0
    %607 = vmatpush1.msra.mxu0 %v568
    %608 = vmatprep.subr.mxu0 0.0
    %609 = vmatpush1.msra.mxu0 0.0
    %610 = vmatprep.subr.mxu0 0.0
    %611 = vmatpush1.msra.mxu0 0.0
    %612 = vmatprep.subr.mxu0 0.0
    %613 = vmatpush1.msra.mxu0 0.0
    %614 = vmatprep.subr.mxu0 0.0
    %615 = vmatpush1.msra.mxu0 0.0
    %616 = vmatprep.subr.mxu0 0.0
    %617 = vmatpush1.msra.mxu0 0.0
    %618 = vmatprep.subr.mxu0 0.0
    %619 = vmatpush1.msra.mxu0 0.0
    %620 = vmatprep.subr.mxu0 0.0
    %621 = vmatpush1.msra.mxu0 0.0
    %622 = vmatprep.subr.mxu0 0.0
    %623 = vmatpush1.msra.mxu0 0.0
    %624 = vmatprep.subr.mxu0 0.0
    %625 = vmatpush1.msra.mxu0 0.0
    %626 = vmatprep.subr.mxu0 0.0
    %627 = vmatpush1.msra.mxu0 0.0
    %628 = vmatprep.subr.mxu0 0.0
    %629 = vmatpush1.msra.mxu0 0.0
    %630 = vmatprep.subr.mxu0 0.0
    %631 = vmatpush1.msra.mxu0 0.0
    %632 = vmatprep.subr.mxu0 0.0
    %633 = vmatpush1.msra.mxu0 0.0
    %634 = vmatprep.subr.mxu0 0.0
    %635 = vmatpush1.msra.mxu0 0.0
    %636 = vmatprep.subr.mxu0 0.0
    %637 = vmatpush1.msra.mxu0 0.0
    %638 = vmatprep.subr.mxu0 0.0
    %639 = vmatpush1.msra.mxu0 0.0
    %640 = vmatprep.mubr.f32.mxu0 0.0
    %641 = vmatmul.mubr.f32.gmra.mrb[0].mxu0 %v552
    %v642 = vpop.f32.mrb[0].mxu0
    %v643 = vadd.f32 %v574, %v642
    %v644 = vpop.f32.mrb[0].mxu0
    %645 = vdwg.mxu0
    %646 = vst [vmem:[#allocation10] sm:$0xff] %v643
    // Predicated region
    $region46: #{tpu_custom_call.1} parent=1 // pred_check
      _
    $region47: #{tpu_custom_call.1} parent=1 // pred_check_branch
      %648 = sbr.rel (0) target = $region49
    $region48: #{tpu_custom_call.1} parent=1 // pred_region
      %s650 = ssub.s32 128, 128
      %651 = vsyncadd [#allocation4], %s650
      %s653 = sshll.u32 [#allocation10], 4
      %s654 = int_to_ptr.vmem [resolvable:$true] %s653
      %656 = dma.vmem_to_hbm [thread:$0]  %s654, 128, %s7, [#allocation4]
    $region49: #{tpu_custom_call.1} parent=1 // pred_fallthru
      _
    // Predicated region
    $region50: #{tpu_custom_call.1} parent=1 // pred_check
      _
    $region51: #{tpu_custom_call.1} parent=1 // pred_check_branch
      %658 = sbr.rel (0) target = $region53
    $region52: #{tpu_custom_call.1} parent=1 // pred_region
      %659 = dma.done [#allocation4], 128
    $region53: #{tpu_custom_call.1} parent=1 // pred_fallthru
      _
    %660 = vsyncpa [#allocation3], 1
    %661 = vsyncpa [#allocation6], 1
    %662 = vsyncpa [#allocation9], 1
    %663 = vsyncpa [#allocation4], 1

</llo_original>
